<compile_context>
chip_gen: v7x
topology: tpu7x:2x2x1
jax: 0.10.0
libtpu: 0.0.40
codegen_flags: <defaults>
</compile_context>

<pallas_src>
import jax
import jax.numpy as jnp
from jax.experimental import pallas as pl
from jax.experimental.pallas import tpu as pltpu

IN_DIM = 4
HIDDEN = 130
OUT_DIM = 4
HIDDEN_PAD = 256  # 130 rounded up to the next multiple of 128 lanes


def mlp_kernel(x_ref, w1_ref, b1_ref, w2_ref, b2_ref, w3_ref, b3_ref, o_ref):
    # fc1 + ReLU.  K=4 contraction under-utilizes the MXU but is negligible
    # next to fc2; bias/ReLU run in f32 (no bf16-VPU dependence on v5e).
    x = x_ref[...].astype(jnp.bfloat16)
    h1 = jnp.dot(x, w1_ref[...], preferred_element_type=jnp.float32)
    h1 = jnp.maximum(h1 + b1_ref[...], 0.0)

    # fc2 + ReLU (dominant 256x256-padded matmul, bf16 in / f32 acc).
    h2 = jnp.dot(h1.astype(jnp.bfloat16), w2_ref[...],
                 preferred_element_type=jnp.float32)
    h2 = jnp.maximum(h2 + b2_ref[...], 0.0)

    # fc3 (no activation).
    out = jnp.dot(h2.astype(jnp.bfloat16), w3_ref[...],
                  preferred_element_type=jnp.float32)
    o_ref[...] = (out + b3_ref[...]).astype(o_ref.dtype)


def _round_up(n, m):
    return ((n + m - 1) // m) * m


def net_forward(x, params, *, tile_b=2048):
    """x: (B, 4) f32.  params: padded bf16 weights + f32 biases (see init)."""
    w1, b1, w2, b2, w3, b3 = params
    B = x.shape[0]

    # Batch tile: large by default (amortize per-step overhead, keep the DMA
    # pipeline busy), shrunk to an 8-row multiple for tiny batches.
    TB = min(tile_b, _round_up(B, 8))
    Bp = _round_up(B, TB)
    if Bp != B:
        x = jnp.pad(x, ((0, Bp - B), (0, 0)))  # zero rows; sliced off below

    grid = (Bp // TB,)
    const = lambda i: (0, 0)  # weights/biases: same block every step -> resident

    flops = 2 * Bp * (IN_DIM * HIDDEN_PAD
                      + HIDDEN_PAD * HIDDEN_PAD
                      + HIDDEN_PAD * OUT_DIM)
    bytes_accessed = (
        Bp * IN_DIM * 4 + Bp * OUT_DIM * 4
        + sum(int(a.size) * a.dtype.itemsize for a in (w1, b1, w2, b2, w3, b3)))

    out = pl.pallas_call(
        mlp_kernel,
        out_shape=jax.ShapeDtypeStruct((Bp, OUT_DIM), jnp.float32),
        grid=grid,
        in_specs=[
            pl.BlockSpec((TB, IN_DIM), lambda i: (i, 0)),  # streamed activations
            pl.BlockSpec(w1.shape, const),
            pl.BlockSpec(b1.shape, const),
            pl.BlockSpec(w2.shape, const),
            pl.BlockSpec(b2.shape, const),
            pl.BlockSpec(w3.shape, const),
            pl.BlockSpec(b3.shape, const),
        ],
        out_specs=pl.BlockSpec((TB, OUT_DIM), lambda i: (i, 0)),
        compiler_params=pltpu.CompilerParams(
            dimension_semantics=("parallel",)),  # megacore sharding on v7x
        cost_estimate=pl.CostEstimate(flops=flops, transcendentals=0,
                                      bytes_accessed=bytes_accessed),
    )(x, w1, b1, w2, b2, w3, b3)
    return out[:B]


def init_params(key):
    """PyTorch-nn.Linear-style init.  Weights are stored transposed (in, out),
    zero-padded on the 130-wide hidden axis to 256 and cast to bf16; biases
    stay f32, padded with zeros.  Returns (packed_kernel_params, raw_f32)."""
    dims = [(IN_DIM, HIDDEN), (HIDDEN, HIDDEN), (HIDDEN, OUT_DIM)]
    pads = [(IN_DIM, HIDDEN_PAD), (HIDDEN_PAD, HIDDEN_PAD), (HIDDEN_PAD, OUT_DIM)]
    raw, packed = [], []
    for (fi, fo), (pi, po) in zip(dims, pads):
        key, kw, kb = jax.random.split(key, 3)
        bound = 1.0 / (fi ** 0.5)
        w = jax.random.uniform(kw, (fi, fo), jnp.float32, -bound, bound)
        b = jax.random.uniform(kb, (1, fo), jnp.float32, -bound, bound)
        raw += [w, b]
        wp = jnp.zeros((pi, po), jnp.float32).at[:fi, :fo].set(w)
        bp = jnp.zeros((1, po), jnp.float32).at[:, :fo].set(b)
        packed += [wp.astype(jnp.bfloat16), bp]
    return tuple(packed), tuple(raw)


if __name__ == "__main__":
    key = jax.random.PRNGKey(0)
    kx, kp = jax.random.split(key)

    # Small but deliberately ragged batch: exercises row padding and a
    # multi-step (grid > 1) pipeline with resident weights.
    batch = 37
    x = jax.random.normal(kx, (batch, IN_DIM), jnp.float32)
    params, raw = init_params(kp)

    out = jax.block_until_ready(net_forward(x, params, tile_b=16))

    # Pure-JAX f32 reference; kernel uses bf16 matmul inputs with f32
    # accumulation, so compare with a bf16-level tolerance.
    w1, b1, w2, b2, w3, b3 = raw
    ref = jnp.maximum(x @ w1 + b1, 0.0)
    ref = jnp.maximum(ref @ w2 + b2, 0.0)
    ref = ref @ w3 + b3

    assert out.shape == (batch, OUT_DIM)
    assert jnp.allclose(out, ref, atol=5e-2, rtol=5e-2), float(
        jnp.max(jnp.abs(out - ref)))

    print("KERNEL_OK")
</pallas_src>

<mosaic_0001>
module attributes {stable_mosaic.version = 11 : i64} {
  func.func @mlp_kernel(%arg0: i32, %arg1: memref<16x4xf32, #tpu.memory_space<vmem>>, %arg2: memref<4x256xbf16, #tpu.memory_space<vmem>>, %arg3: memref<1x256xf32, #tpu.memory_space<vmem>>, %arg4: memref<256x256xbf16, #tpu.memory_space<vmem>>, %arg5: memref<1x256xf32, #tpu.memory_space<vmem>>, %arg6: memref<256x4xbf16, #tpu.memory_space<vmem>>, %arg7: memref<1x4xf32, #tpu.memory_space<vmem>>, %arg8: memref<16x4xf32, #tpu.memory_space<vmem>>) attributes {dimension_semantics = [#tpu.dimension_semantics<parallel>], iteration_bounds = array<i64: 3>, scalar_prefetch = 0 : i64, scratch_operands = 0 : i64, tpu.core_type = #tpu.core_type<tc>, window_params = [{transform_indices = @transform_0, window_bounds = array<i64: 16, 4>}, {pipeline_mode = #tpu.pipeline_mode<synchronous>, transform_indices = @transform_1, window_bounds = array<i64: 4, 256>}, {pipeline_mode = #tpu.pipeline_mode<synchronous>, transform_indices = @transform_2, window_bounds = array<i64: 1, 256>}, {pipeline_mode = #tpu.pipeline_mode<synchronous>, transform_indices = @transform_3, window_bounds = array<i64: 256, 256>}, {pipeline_mode = #tpu.pipeline_mode<synchronous>, transform_indices = @transform_4, window_bounds = array<i64: 1, 256>}, {pipeline_mode = #tpu.pipeline_mode<synchronous>, transform_indices = @transform_5, window_bounds = array<i64: 256, 4>}, {pipeline_mode = #tpu.pipeline_mode<synchronous>, transform_indices = @transform_6, window_bounds = array<i64: 1, 4>}, {transform_indices = @transform_7, window_bounds = array<i64: 16, 4>}]} {
    %c0 = arith.constant 0 : index
    %c0_0 = arith.constant 0 : index
    %0 = vector.load %arg1[%c0, %c0_0] : memref<16x4xf32, #tpu.memory_space<vmem>>, vector<16x4xf32>
    %1 = arith.truncf %0 : vector<16x4xf32> to vector<16x4xbf16>
    %c0_1 = arith.constant 0 : index
    %c0_2 = arith.constant 0 : index
    %2 = vector.load %arg2[%c0_1, %c0_2] : memref<4x256xbf16, #tpu.memory_space<vmem>>, vector<4x256xbf16>
    %cst = arith.constant dense<0.000000e+00> : vector<16x256xf32>
    %3 = tpu.matmul %1, %2, %cst {dimension_numbers = #tpu.dot_dimension_numbers<[1], [0], [0], [1], [0, 0, 1, 1], [], []>} : vector<16x4xbf16>, vector<4x256xbf16>, vector<16x256xf32> -> vector<16x256xf32>
    %c0_3 = arith.constant 0 : index
    %c0_4 = arith.constant 0 : index
    %4 = vector.load %arg3[%c0_3, %c0_4] : memref<1x256xf32, #tpu.memory_space<vmem>>, vector<1x256xf32>
    %5 = vector.broadcast %4 : vector<1x256xf32> to vector<16x256xf32>
    %6 = arith.addf %3, %5 : vector<16x256xf32>
    %cst_5 = arith.constant 0.000000e+00 : f32
    %7 = vector.broadcast %cst_5 : f32 to vector<16x256xf32>
    %8 = arith.maximumf %6, %7 : vector<16x256xf32>
    %9 = arith.truncf %8 : vector<16x256xf32> to vector<16x256xbf16>
    %c0_6 = arith.constant 0 : index
    %c0_7 = arith.constant 0 : index
    %10 = vector.load %arg4[%c0_6, %c0_7] : memref<256x256xbf16, #tpu.memory_space<vmem>>, vector<256x256xbf16>
    %cst_8 = arith.constant dense<0.000000e+00> : vector<16x256xf32>
    %11 = tpu.matmul %9, %10, %cst_8 {dimension_numbers = #tpu.dot_dimension_numbers<[1], [0], [0], [1], [0, 0, 1, 1], [], []>} : vector<16x256xbf16>, vector<256x256xbf16>, vector<16x256xf32> -> vector<16x256xf32>
    %c0_9 = arith.constant 0 : index
    %c0_10 = arith.constant 0 : index
    %12 = vector.load %arg5[%c0_9, %c0_10] : memref<1x256xf32, #tpu.memory_space<vmem>>, vector<1x256xf32>
    %13 = vector.broadcast %12 : vector<1x256xf32> to vector<16x256xf32>
    %14 = arith.addf %11, %13 : vector<16x256xf32>
    %cst_11 = arith.constant 0.000000e+00 : f32
    %15 = vector.broadcast %cst_11 : f32 to vector<16x256xf32>
    %16 = arith.maximumf %14, %15 : vector<16x256xf32>
    %17 = arith.truncf %16 : vector<16x256xf32> to vector<16x256xbf16>
    %c0_12 = arith.constant 0 : index
    %c0_13 = arith.constant 0 : index
    %18 = vector.load %arg6[%c0_12, %c0_13] : memref<256x4xbf16, #tpu.memory_space<vmem>>, vector<256x4xbf16>
    %cst_14 = arith.constant dense<0.000000e+00> : vector<16x4xf32>
    %19 = tpu.matmul %17, %18, %cst_14 {dimension_numbers = #tpu.dot_dimension_numbers<[1], [0], [0], [1], [0, 0, 1, 1], [], []>} : vector<16x256xbf16>, vector<256x4xbf16>, vector<16x4xf32> -> vector<16x4xf32>
    %c0_15 = arith.constant 0 : index
    %c0_16 = arith.constant 0 : index
    %20 = vector.load %arg7[%c0_15, %c0_16] : memref<1x4xf32, #tpu.memory_space<vmem>>, vector<1x4xf32>
    %21 = vector.broadcast %20 : vector<1x4xf32> to vector<16x4xf32>
    %22 = arith.addf %19, %21 : vector<16x4xf32>
    %c0_17 = arith.constant 0 : index
    %c0_18 = arith.constant 0 : index
    %23 = vector.load %arg8[%c0_17, %c0_18] : memref<16x4xf32, #tpu.memory_space<vmem>>, vector<16x4xf32>
    tpu.vector_store %arg8[%c0_17, %c0_18], %22 {strides = array<i32>} : memref<16x4xf32, #tpu.memory_space<vmem>>, vector<16x4xf32>,
    return
  }
  func.func @transform_0(%arg0: i32) -> (i32, i32) {
    %c0_i32 = arith.constant 0 : i32
    %c0_i32_0 = arith.constant 0 : i32
    return %arg0, %c0_i32 : i32, i32
  }
  func.func @transform_1(%arg0: i32) -> (i32, i32) {
    %c0_i32 = arith.constant 0 : i32
    %c0_i32_0 = arith.constant 0 : i32
    %c0_i32_1 = arith.constant 0 : i32
    return %c0_i32, %c0_i32_0 : i32, i32
  }
  func.func @transform_2(%arg0: i32) -> (i32, i32) {
    %c0_i32 = arith.constant 0 : i32
    %c0_i32_0 = arith.constant 0 : i32
    %c0_i32_1 = arith.constant 0 : i32
    return %c0_i32, %c0_i32_0 : i32, i32
  }
  func.func @transform_3(%arg0: i32) -> (i32, i32) {
    %c0_i32 = arith.constant 0 : i32
    %c0_i32_0 = arith.constant 0 : i32
    %c0_i32_1 = arith.constant 0 : i32
    return %c0_i32, %c0_i32_0 : i32, i32
  }
  func.func @transform_4(%arg0: i32) -> (i32, i32) {
    %c0_i32 = arith.constant 0 : i32
    %c0_i32_0 = arith.constant 0 : i32
    %c0_i32_1 = arith.constant 0 : i32
    return %c0_i32, %c0_i32_0 : i32, i32
  }
  func.func @transform_5(%arg0: i32) -> (i32, i32) {
    %c0_i32 = arith.constant 0 : i32
    %c0_i32_0 = arith.constant 0 : i32
    %c0_i32_1 = arith.constant 0 : i32
    return %c0_i32, %c0_i32_0 : i32, i32
  }
  func.func @transform_6(%arg0: i32) -> (i32, i32) {
    %c0_i32 = arith.constant 0 : i32
    %c0_i32_0 = arith.constant 0 : i32
    %c0_i32_1 = arith.constant 0 : i32
    return %c0_i32, %c0_i32_0 : i32, i32
  }
  func.func @transform_7(%arg0: i32) -> (i32, i32) {
    %c0_i32 = arith.constant 0 : i32
    %c0_i32_0 = arith.constant 0 : i32
    return %arg0, %c0_i32 : i32, i32
  }
}

</mosaic_0001>

<llo_original>
// kernel: tpu_custom_call.1
$region0: #{tpu_custom_call.1}
  #allocation0 [shape = 'u32[]', space=smem, size = 0x4, offset = 0x4, fixed_abs, tag = 'smem constant byte address 0x4 - core index']
  #allocation1 [shape = 'u32[144,128]{1,0:T(1,128)}', space=vmem, size = 0x12000, scoped, tag = 'internal scratch']
  %s0 = inlined_call_operand.vmem [shape: f32[48,4], index: 0, kind: input, shape index: {}]
  %s1 = inlined_call_operand.vmem [shape: bf16[4,256], index: 1, kind: input, shape index: {}]
  %s2 = inlined_call_operand.vmem [shape: f32[1,256], index: 2, kind: input, shape index: {}]
  %s3 = inlined_call_operand.hbm [shape: bf16[256,256], index: 3, kind: input, shape index: {}]
  %s4 = inlined_call_operand.vmem [shape: f32[1,256], index: 4, kind: input, shape index: {}]
  %s5 = inlined_call_operand.vmem [shape: bf16[256,4], index: 5, kind: input, shape index: {}]
  %s6 = inlined_call_operand.vmem [shape: f32[1,4], index: 6, kind: input, shape index: {}]
  %s7 = inlined_call_operand.vmem [shape: f32[48,4], index: 7, kind: output, shape index: {}]
  %s8 = sld [smem:[#allocation0]]
  $region65: #{tpu_custom_call.1} parent=0
    _
  %s10 = ssub.s32 1, %s8
  %s11 = scalar_select 0, %s10, %s8
  $region1: #{tpu_custom_call.1} parent=0
    #allocation2 [shape = 'u8[131072]{0}', space=vmem, size = 0x20000, scoped, tag = 'input window, operand 3, single buffered']
    #allocation3 [shape = 's32[2]{0}', space=sflag, size = 0x8, scoped, tag = 'scoped memory for tpu_custom_call.1']
    %12 = vsyncpa [#allocation3], 0
    loop: start=0, step=1, limit=5
    $region2: #{tpu_custom_call.1} parent=1 // loop_pre_header
      _
    $region3: #{tpu_custom_call.1} parent=1 // loop_header
      %s14 = sphi 0, %s18
      %p15 = scmp.ge.s32.totalorder %s14, 5
      %s24 = sphi 0, %s26
      %s27 = sphi 0, %s24
      %s28 = sphi 0, %s27
      %s44 = sphi 0, %s28
      %s48 = sphi 0, %s48
      %s50 = sphi 0, %s48
      %s51 = sphi 0, %s50
      %s65 = sphi 0, %s51
      %s69 = sphi 0, %s69
      %s71 = sphi 0, %s69
      %s72 = sphi 0, %s71
      %s86 = sphi 0, %s72
      %s90 = sphi 0, %s90
      %s92 = sphi 0, %s90
      %s93 = sphi 0, %s92
      %s107 = sphi 0, %s93
      %s111 = sphi 0, %s111
      %s113 = sphi 0, %s111
      %s114 = sphi 0, %s113
      %s128 = sphi 0, %s114
      %s132 = sphi 0, %s132
      %s134 = sphi 0, %s132
      %s135 = sphi 0, %s134
      %s149 = sphi 0, %s135
      %s153 = sphi 0, %s153
      %s155 = sphi 0, %s153
      %s156 = sphi 0, %s155
      %s170 = sphi 0, %s156
      %s176 = sphi 0, %s178
      %s179 = sphi 0, %s176
      %s180 = sphi 0, %s179
      %s196 = sphi 0, %s180
    $region4: #{tpu_custom_call.1} parent=1 // loop_header_branch
      %17 = sbr.rel (%p15) target = $region8
    $region5: #{tpu_custom_call.1} parent=1 // loop_body
      %s19 = ssub.s32 %s14, 1
      %s20 = ssub.s32 %s14, 2
      %s21 = sadd.s32 %s14, 1
      %s22 = ssub.s32 %s14, %s21
      %p23 = scmp.eq.s32.totalorder %s22, 0
      %s25 = sadd.s32 %s24, 1
      %s26 = scalar_select %p23, %s24, %s25
      %p29 = pneg %p23
      %p30 = scmp.eq.s32.totalorder %s14, 2
      %p31 = por %p29, %p30
      %p32 = scmp.ne.s32.totalorder %s24, %s27
      %p33 = scmp.eq.s32.totalorder %s14, 0
      %p34 = por %p32, %p33
      %p35 = scmp.ne.s32.totalorder %s24, %s27
      %p36 = scmp.eq.s32.totalorder %s19, 2
      %p37 = por %p35, %p36
      %p38 = scmp.ne.s32.totalorder %s27, %s28
      %p39 = scmp.eq.s32.totalorder %s19, 0
      %p40 = por %p38, %p39
      %p41 = scmp.ne.s32.totalorder %s27, %s28
      %p42 = scmp.eq.s32.totalorder %s20, 2
      %p43 = por %p41, %p42
      %p45 = scmp.ne.s32.totalorder %s28, %s44
      %p46 = scmp.eq.s32.totalorder %s20, 0
      %p47 = por %p45, %p46
      %s49 = sadd.s32 %s48, 1
      %p52 = scmp.eq.s32.totalorder %s14, 2
      %p53 = scmp.ne.s32.totalorder %s48, %s50
      %p54 = scmp.eq.s32.totalorder %s14, 0
      %p55 = por %p53, %p54
      %p56 = scmp.ne.s32.totalorder %s48, %s50
      %p57 = scmp.eq.s32.totalorder %s19, 2
      %p58 = por %p56, %p57
      %p59 = scmp.ne.s32.totalorder %s50, %s51
      %p60 = scmp.eq.s32.totalorder %s19, 0
      %p61 = por %p59, %p60
      %p62 = scmp.ne.s32.totalorder %s50, %s51
      %p63 = scmp.eq.s32.totalorder %s20, 2
      %p64 = por %p62, %p63
      %p66 = scmp.ne.s32.totalorder %s51, %s65
      %p67 = scmp.eq.s32.totalorder %s20, 0
      %p68 = por %p66, %p67
      %s70 = sadd.s32 %s69, 1
      %p73 = scmp.eq.s32.totalorder %s14, 2
      %p74 = scmp.ne.s32.totalorder %s69, %s71
      %p75 = scmp.eq.s32.totalorder %s14, 0
      %p76 = por %p74, %p75
      %p77 = scmp.ne.s32.totalorder %s69, %s71
      %p78 = scmp.eq.s32.totalorder %s19, 2
      %p79 = por %p77, %p78
      %p80 = scmp.ne.s32.totalorder %s71, %s72
      %p81 = scmp.eq.s32.totalorder %s19, 0
      %p82 = por %p80, %p81
      %p83 = scmp.ne.s32.totalorder %s71, %s72
      %p84 = scmp.eq.s32.totalorder %s20, 2
      %p85 = por %p83, %p84
      %p87 = scmp.ne.s32.totalorder %s72, %s86
      %p88 = scmp.eq.s32.totalorder %s20, 0
      %p89 = por %p87, %p88
      %s91 = sadd.s32 %s90, 1
      %p94 = scmp.eq.s32.totalorder %s14, 2
      %p95 = scmp.ne.s32.totalorder %s90, %s92
      %p96 = scmp.eq.s32.totalorder %s14, 0
      %p97 = por %p95, %p96
      %p98 = scmp.ne.s32.totalorder %s90, %s92
      %p99 = scmp.eq.s32.totalorder %s19, 2
      %p100 = por %p98, %p99
      %p101 = scmp.ne.s32.totalorder %s92, %s93
      %p102 = scmp.eq.s32.totalorder %s19, 0
      %p103 = por %p101, %p102
      %p104 = scmp.ne.s32.totalorder %s92, %s93
      %p105 = scmp.eq.s32.totalorder %s20, 2
      %p106 = por %p104, %p105
      %p108 = scmp.ne.s32.totalorder %s93, %s107
      %p109 = scmp.eq.s32.totalorder %s20, 0
      %p110 = por %p108, %p109
      %s112 = sadd.s32 %s111, 1
      %p115 = scmp.eq.s32.totalorder %s14, 2
      %p116 = scmp.ne.s32.totalorder %s111, %s113
      %p117 = scmp.eq.s32.totalorder %s14, 0
      %p118 = por %p116, %p117
      %p119 = scmp.ne.s32.totalorder %s111, %s113
      %p120 = scmp.eq.s32.totalorder %s19, 2
      %p121 = por %p119, %p120
      %p122 = scmp.ne.s32.totalorder %s113, %s114
      %p123 = scmp.eq.s32.totalorder %s19, 0
      %p124 = por %p122, %p123
      %p125 = scmp.ne.s32.totalorder %s113, %s114
      %p126 = scmp.eq.s32.totalorder %s20, 2
      %p127 = por %p125, %p126
      %p129 = scmp.ne.s32.totalorder %s114, %s128
      %p130 = scmp.eq.s32.totalorder %s20, 0
      %p131 = por %p129, %p130
      %s133 = sadd.s32 %s132, 1
      %p136 = scmp.eq.s32.totalorder %s14, 2
      %p137 = scmp.ne.s32.totalorder %s132, %s134
      %p138 = scmp.eq.s32.totalorder %s14, 0
      %p139 = por %p137, %p138
      %p140 = scmp.ne.s32.totalorder %s132, %s134
      %p141 = scmp.eq.s32.totalorder %s19, 2
      %p142 = por %p140, %p141
      %p143 = scmp.ne.s32.totalorder %s134, %s135
      %p144 = scmp.eq.s32.totalorder %s19, 0
      %p145 = por %p143, %p144
      %p146 = scmp.ne.s32.totalorder %s134, %s135
      %p147 = scmp.eq.s32.totalorder %s20, 2
      %p148 = por %p146, %p147
      %p150 = scmp.ne.s32.totalorder %s135, %s149
      %p151 = scmp.eq.s32.totalorder %s20, 0
      %p152 = por %p150, %p151
      %s154 = sadd.s32 %s153, 1
      %p157 = scmp.eq.s32.totalorder %s14, 2
      %p158 = scmp.ne.s32.totalorder %s153, %s155
      %p159 = scmp.eq.s32.totalorder %s14, 0
      %p160 = por %p158, %p159
      %p161 = scmp.ne.s32.totalorder %s153, %s155
      %p162 = scmp.eq.s32.totalorder %s19, 2
      %p163 = por %p161, %p162
      %p164 = scmp.ne.s32.totalorder %s155, %s156
      %p165 = scmp.eq.s32.totalorder %s19, 0
      %p166 = por %p164, %p165
      %p167 = scmp.ne.s32.totalorder %s155, %s156
      %p168 = scmp.eq.s32.totalorder %s20, 2
      %p169 = por %p167, %p168
      %p171 = scmp.ne.s32.totalorder %s156, %s170
      %p172 = scmp.eq.s32.totalorder %s20, 0
      %p173 = por %p171, %p172
      %s174 = ssub.s32 %s14, %s21
      %p175 = scmp.eq.s32.totalorder %s174, 0
      %s177 = sadd.s32 %s176, 1
      %s178 = scalar_select %p175, %s176, %s177
      %p181 = pneg %p175
      %p182 = scmp.eq.s32.totalorder %s14, 2
      %p183 = por %p181, %p182
      %p184 = scmp.ne.s32.totalorder %s176, %s179
      %p185 = scmp.eq.s32.totalorder %s14, 0
      %p186 = por %p184, %p185
      %p187 = scmp.ne.s32.totalorder %s176, %s179
      %p188 = scmp.eq.s32.totalorder %s19, 2
      %p189 = por %p187, %p188
      %p190 = scmp.ne.s32.totalorder %s179, %s180
      %p191 = scmp.eq.s32.totalorder %s19, 0
      %p192 = por %p190, %p191
      %p193 = scmp.ne.s32.totalorder %s179, %s180
      %p194 = scmp.eq.s32.totalorder %s20, 2
      %p195 = por %p193, %p194
      %p197 = scmp.ne.s32.totalorder %s180, %s196
      %p198 = scmp.eq.s32.totalorder %s20, 0
      %p199 = por %p197, %p198
      %p200 = scmp.le.s32.totalorder 1, %s14
      %p201 = scmp.lt.s32.totalorder %s14, 4
      %p202 = pnand %p200, %p201
      %p203 = pneg %p202
      // Predicated region
      $region9: #{tpu_custom_call.1} parent=5 // pred_check
        _
      $region10: #{tpu_custom_call.1} parent=5 // pred_check_branch
        %205 = sbr.rel (%p202) target = $region12
      $region11: #{tpu_custom_call.1} parent=5 // pred_region
        %s206 = ssub.s32 %s14, 1
        // Predicated region
        $region13: #{tpu_custom_call.1} parent=11 // pred_check
          %p207 = pneg %p61
        $region14: #{tpu_custom_call.1} parent=11 // pred_check_branch
          %209 = sbr.rel (%p207) target = $region16
        $region15: #{tpu_custom_call.1} parent=11 // pred_region
          _
        $region16: #{tpu_custom_call.1} parent=11 // pred_fallthru
          _
        // Predicated region
        $region17: #{tpu_custom_call.1} parent=11 // pred_check
          %p210 = pneg %p82
        $region18: #{tpu_custom_call.1} parent=11 // pred_check_branch
          %212 = sbr.rel (%p210) target = $region20
        $region19: #{tpu_custom_call.1} parent=11 // pred_region
          _
        $region20: #{tpu_custom_call.1} parent=11 // pred_fallthru
          _
        // Predicated region
        $region21: #{tpu_custom_call.1} parent=11 // pred_check
          %p213 = pneg %p103
        $region22: #{tpu_custom_call.1} parent=11 // pred_check_branch
          %215 = sbr.rel (%p213) target = $region24
        $region23: #{tpu_custom_call.1} parent=11 // pred_region
          %s217 = ssub.s32 4096, 4096
          %218 = vsyncadd [#allocation3], %s217
          %s219 = sshll.u32 [#allocation2], 4
          %s220 = int_to_ptr.vmem [resolvable:$true] %s219
          %225 = dma.hbm_to_vmem [thread:$0]  %s3, 4096, %s220, [#allocation3], 128, 128, 8
        $region24: #{tpu_custom_call.1} parent=11 // pred_fallthru
          _
        // Predicated region
        $region25: #{tpu_custom_call.1} parent=11 // pred_check
          %p226 = pneg %p124
        $region26: #{tpu_custom_call.1} parent=11 // pred_check_branch
          %228 = sbr.rel (%p226) target = $region28
        $region27: #{tpu_custom_call.1} parent=11 // pred_region
          _
        $region28: #{tpu_custom_call.1} parent=11 // pred_fallthru
          _
        // Predicated region
        $region29: #{tpu_custom_call.1} parent=11 // pred_check
          %p229 = pneg %p145
        $region30: #{tpu_custom_call.1} parent=11 // pred_check_branch
          %231 = sbr.rel (%p229) target = $region32
        $region31: #{tpu_custom_call.1} parent=11 // pred_region
          _
        $region32: #{tpu_custom_call.1} parent=11 // pred_fallthru
          _
        // Predicated region
        $region33: #{tpu_custom_call.1} parent=11 // pred_check
          %p232 = pneg %p166
        $region34: #{tpu_custom_call.1} parent=11 // pred_check_branch
          %234 = sbr.rel (%p232) target = $region36
        $region35: #{tpu_custom_call.1} parent=11 // pred_region
          _
        $region36: #{tpu_custom_call.1} parent=11 // pred_fallthru
          _
      $region12: #{tpu_custom_call.1} parent=5 // pred_fallthru
        _
      %p235 = scmp.lt.s32.totalorder %s14, 3
      // Predicated region
      $region37: #{tpu_custom_call.1} parent=5 // pred_check
        %p236 = pneg %p235
      $region38: #{tpu_custom_call.1} parent=5 // pred_check_branch
        %238 = sbr.rel (%p236) target = $region40
      $region39: #{tpu_custom_call.1} parent=5 // pred_region
        // Predicated region
        $region41: #{tpu_custom_call.1} parent=39 // pred_check
          %p239 = pneg %p34
        $region42: #{tpu_custom_call.1} parent=39 // pred_check_branch
          %241 = sbr.rel (%p239) target = $region44
        $region43: #{tpu_custom_call.1} parent=39 // pred_region
          %s242 = smul.u32 2, %s14
          %p243 = scmp.lt.s32.totalorder %s242, 5
          %s244 = scalar_select %p243, %s242, 5
          %s245 = smul.addr %s244, 8
          %s246 = scalar_lea.vmem %s0, %s245
          %s247 = smul.u32 2, %s14
        $region44: #{tpu_custom_call.1} parent=39 // pred_fallthru
          _
      $region40: #{tpu_custom_call.1} parent=5 // pred_fallthru
        _
      %p248 = scmp.le.s32.totalorder 1, %s14
      %p249 = scmp.lt.s32.totalorder %s14, 4
      %p250 = pnand %p248, %p249
      %p251 = pneg %p250
      // Predicated region
      $region45: #{tpu_custom_call.1} parent=5 // pred_check
        _
      $region46: #{tpu_custom_call.1} parent=5 // pred_check_branch
        %253 = sbr.rel (%p250) target = $region48
      $region47: #{tpu_custom_call.1} parent=5 // pred_region
        %s254 = ssub.s32 %s14, 1
        // Predicated region
        $region49: #{tpu_custom_call.1} parent=47 // pred_check
          %p255 = pneg %p103
        $region50: #{tpu_custom_call.1} parent=47 // pred_check_branch
          %257 = sbr.rel (%p255) target = $region52
        $region51: #{tpu_custom_call.1} parent=47 // pred_region
          %258 = dma.done [#allocation3], 4096
        $region52: #{tpu_custom_call.1} parent=47 // pred_fallthru
          _
        %s259 = smul.u32 2, %s19
        %p260 = scmp.lt.s32.totalorder %s259, 5
        %s261 = scalar_select %p260, %s259, 5
        %s262 = smul.addr %s261, 8
        %s263 = scalar_lea.vmem %s0, %s262
        %p264 = pneg %p40
        %p265 = pneg %p37
        %p266 = pneg %p61
        %p267 = pneg %p58
        %p268 = pneg %p82
        %p269 = pneg %p79
        %p270 = pneg %p103
        %p271 = pneg %p100
        %p272 = pneg %p124
        %p273 = pneg %p121
        %p274 = pneg %p145
        %p275 = pneg %p142
        %p276 = pneg %p166
        %p277 = pneg %p163
        %p278 = pneg %p192
        %p279 = pneg %p189
        %s280 = smul.u32 2, %s19
        %p281 = scmp.lt.s32.totalorder %s280, 5
        %s282 = scalar_select %p281, %s280, 5
        %s283 = smul.addr %s282, 8
        %s284 = scalar_lea.vmem %s7, %s283
        %s285 = smul.u32 2, %s19
        %p286 = scmp.lt.s32.totalorder %s285, 5
        %s287 = scalar_select %p286, %s285, 5
        %s288 = smul.addr %s287, 8
        %s289 = scalar_lea.vmem %s0, %s288
        %s290 = smul.u32 2, %s19
        %s291 = smul.u32 2, %s19
        %p292 = scmp.lt.s32.totalorder %s291, 5
        %s293 = scalar_select %p292, %s291, 5
        %s294 = smul.addr %s293, 8
        %s295 = scalar_lea.vmem %s7, %s294
        %s296 = smul.u32 2, %s19
        %v298 = vld [vmem:[%s289] sm:$0xff]
        %v299 = vld [vmem:[%s289 + $0x8] sm:$0xff]
        %v300 = vpack.c.bf16 %v299, %v298
        %v301 = vld [vmem:[%s1] sm:$0xf]
        %v302 = vld [vmem:[%s2] sm:$0x3]
        %v304 = vlaneseq
        %v305 = vshrl.u32 %v304, 7
        %v306 = vsub.s32 0, %v305
        %v307 = vrot.slane %v302, %v306
        %v308 = vlaneseq
        %v309 = vshrl.u32 %v308, 7
        %v310 = vsub.s32 1, %v309
        %v311 = vrot.slane %v302, %v310
        %v316 = vunpack.c.l.s4 1983009808
        %v317 = vunpack.c.0.s8 %v316
        %v318 = vlaneseq
        %v319 = vshrl.u32 %v318, 7
        %v320 = vsub.s32 %v317, %v319
        %v321 = vrot.slane %v301, %v320
        %v322 = vcombine.high %v321, %v321
        %vm323 = vcmask 31744
        %v325 = vsel %vm323, %v300, 0
        %vm327 = vcmask 1041408
        %v329 = vsel %vm327, %v321, 0
        %v332 = vsel %vm327, %v322, 0
        %334 = vmatprep.subr.bf16.mxu0 %v332
        %335 = vmatpush1.bf16.msra.mxu0 %v329
        %336 = vmatprep.subr.bf16.mxu0 0
        %337 = vmatpush1.bf16.msra.mxu0 0
        %338 = vmatprep.subr.bf16.mxu0 0
        %339 = vmatpush1.bf16.msra.mxu0 0
        %340 = vmatprep.subr.bf16.mxu0 0
        %341 = vmatpush1.bf16.msra.mxu0 0
        %342 = vmatprep.subr.bf16.mxu0 0
        %343 = vmatpush1.bf16.msra.mxu0 0
        %344 = vmatprep.subr.bf16.mxu0 0
        %345 = vmatpush1.bf16.msra.mxu0 0
        %346 = vmatprep.subr.bf16.mxu0 0
        %347 = vmatpush1.bf16.msra.mxu0 0
        %348 = vmatprep.subr.bf16.mxu0 0
        %349 = vmatpush1.bf16.msra.mxu0 0
        %350 = vmatprep.subr.bf16.mxu0 0
        %351 = vmatpush1.bf16.msra.mxu0 0
        %352 = vmatprep.subr.bf16.mxu0 0
        %353 = vmatpush1.bf16.msra.mxu0 0
        %354 = vmatprep.subr.bf16.mxu0 0
        %355 = vmatpush1.bf16.msra.mxu0 0
        %356 = vmatprep.subr.bf16.mxu0 0
        %357 = vmatpush1.bf16.msra.mxu0 0
        %358 = vmatprep.subr.bf16.mxu0 0
        %359 = vmatpush1.bf16.msra.mxu0 0
        %360 = vmatprep.subr.bf16.mxu0 0
        %361 = vmatpush1.bf16.msra.mxu0 0
        %362 = vmatprep.subr.bf16.mxu0 0
        %363 = vmatpush1.bf16.msra.mxu0 0
        %364 = vmatprep.subr.bf16.mxu0 0
        %365 = vmatpush1.bf16.msra.mxu0 0
        %366 = vmatprep.mubr.bf16.mxu0 0
        %367 = vmatmul.mubr.bf16.gmra.mrb[0].mxu0 %v325
        %v368 = vpop.f32.mrb[0].mxu0
        %v369 = vadd.f32 %v307, %v368
        %v370 = vpop.f32.mrb[0].mxu0
        %v371 = vadd.f32 %v311, %v370
        %v372 = vpop.f32.mrb[0].mxu0
        %v373 = vadd.f32 %v307, %v372
        %v374 = vpop.f32.mrb[0].mxu0
        %v375 = vadd.f32 %v311, %v374
        %376 = vdwg.mxu0
        %v377 = vmax.f32 %v369, 0.0
        %v378 = vmax.f32 %v371, 0.0
        %v379 = vmax.f32 %v373, 0.0
        %v380 = vmax.f32 %v375, 0.0
        %v381 = vpack.c.bf16 %v379, %v377
        %v382 = vpack.c.bf16 %v380, %v378
        %v383 = vld [vmem:[#allocation2] sm:$0xff]
        %v384 = vld [vmem:[#allocation2 + $0x8] sm:$0xff]
        %v385 = vld [vmem:[#allocation2 + $0x10] sm:$0xff]
        %v386 = vld [vmem:[#allocation2 + $0x18] sm:$0xff]
        %v387 = vld [vmem:[#allocation2 + $0x20] sm:$0xff]
        %v388 = vld [vmem:[#allocation2 + $0x28] sm:$0xff]
        %v389 = vld [vmem:[#allocation2 + $0x30] sm:$0xff]
        %v390 = vld [vmem:[#allocation2 + $0x38] sm:$0xff]
        %v391 = vld [vmem:[#allocation2 + $0x40] sm:$0xff]
        %v392 = vld [vmem:[#allocation2 + $0x48] sm:$0xff]
        %v393 = vld [vmem:[#allocation2 + $0x50] sm:$0xff]
        %v394 = vld [vmem:[#allocation2 + $0x58] sm:$0xff]
        %v395 = vld [vmem:[#allocation2 + $0x60] sm:$0xff]
        %v396 = vld [vmem:[#allocation2 + $0x68] sm:$0xff]
        %v397 = vld [vmem:[#allocation2 + $0x70] sm:$0xff]
        %v398 = vld [vmem:[#allocation2 + $0x78] sm:$0xff]
        %v399 = vld [vmem:[#allocation2 + $0x80] sm:$0xff]
        %v400 = vld [vmem:[#allocation2 + $0x88] sm:$0xff]
        %v401 = vld [vmem:[#allocation2 + $0x90] sm:$0xff]
        %v402 = vld [vmem:[#allocation2 + $0x98] sm:$0xff]
        %v403 = vld [vmem:[#allocation2 + $0xa0] sm:$0xff]
        %v404 = vld [vmem:[#allocation2 + $0xa8] sm:$0xff]
        %v405 = vld [vmem:[#allocation2 + $0xb0] sm:$0xff]
        %v406 = vld [vmem:[#allocation2 + $0xb8] sm:$0xff]
        %v407 = vld [vmem:[#allocation2 + $0xc0] sm:$0xff]
        %v408 = vld [vmem:[#allocation2 + $0xc8] sm:$0xff]
        %v409 = vld [vmem:[#allocation2 + $0xd0] sm:$0xff]
        %v410 = vld [vmem:[#allocation2 + $0xd8] sm:$0xff]
        %v411 = vld [vmem:[#allocation2 + $0xe0] sm:$0xff]
        %v412 = vld [vmem:[#allocation2 + $0xe8] sm:$0xff]
        %v413 = vld [vmem:[#allocation2 + $0xf0] sm:$0xff]
        %v414 = vld [vmem:[#allocation2 + $0xf8] sm:$0xff]
        %v415 = vld [vmem:[%s4] sm:$0x3]
        %v417 = vlaneseq
        %v418 = vshrl.u32 %v417, 7
        %v419 = vsub.s32 0, %v418
        %v420 = vrot.slane %v415, %v419
        %v421 = vlaneseq
        %v422 = vshrl.u32 %v421, 7
        %v423 = vsub.s32 1, %v422
        %v424 = vrot.slane %v415, %v423
        %v459 = vunpack.c.l.b16 %v383
        %v460 = vunpack.c.h.b16 %v383
        %v461 = vunpack.c.l.b16 %v384
        %v462 = vunpack.c.h.b16 %v384
        %v463 = vunpack.c.l.b16 %v385
        %v464 = vunpack.c.h.b16 %v385
        %v465 = vunpack.c.l.b16 %v386
        %v466 = vunpack.c.h.b16 %v386
        %v467 = vunpack.c.l.b16 %v387
        %v468 = vunpack.c.h.b16 %v387
        %v469 = vunpack.c.l.b16 %v388
        %v470 = vunpack.c.h.b16 %v388
        %v471 = vunpack.c.l.b16 %v389
        %v472 = vunpack.c.h.b16 %v389
        %v473 = vunpack.c.l.b16 %v390
        %v474 = vunpack.c.h.b16 %v390
        %v475 = vunpack.c.l.b16 %v391
        %v476 = vunpack.c.h.b16 %v391
        %v477 = vunpack.c.l.b16 %v392
        %v478 = vunpack.c.h.b16 %v392
        %v479 = vunpack.c.l.b16 %v393
        %v480 = vunpack.c.h.b16 %v393
        %v481 = vunpack.c.l.b16 %v394
        %v482 = vunpack.c.h.b16 %v394
        %v483 = vunpack.c.l.b16 %v395
        %v484 = vunpack.c.h.b16 %v395
        %v485 = vunpack.c.l.b16 %v396
        %v486 = vunpack.c.h.b16 %v396
        %v487 = vunpack.c.l.b16 %v397
        %v488 = vunpack.c.h.b16 %v397
        %v489 = vunpack.c.l.b16 %v398
        %v490 = vunpack.c.h.b16 %v398
        %v491 = vunpack.c.l.b16 %v399
        %v492 = vunpack.c.h.b16 %v399
        %v493 = vunpack.c.l.b16 %v400
        %v494 = vunpack.c.h.b16 %v400
        %v495 = vunpack.c.l.b16 %v401
        %v496 = vunpack.c.h.b16 %v401
        %v497 = vunpack.c.l.b16 %v402
        %v498 = vunpack.c.h.b16 %v402
        %v499 = vunpack.c.l.b16 %v403
        %v500 = vunpack.c.h.b16 %v403
        %v501 = vunpack.c.l.b16 %v404
        %v502 = vunpack.c.h.b16 %v404
        %v503 = vunpack.c.l.b16 %v405
        %v504 = vunpack.c.h.b16 %v405
        %v505 = vunpack.c.l.b16 %v406
        %v506 = vunpack.c.h.b16 %v406
        %v507 = vunpack.c.l.b16 %v407
        %v508 = vunpack.c.h.b16 %v407
        %v509 = vunpack.c.l.b16 %v408
        %v510 = vunpack.c.h.b16 %v408
        %v511 = vunpack.c.l.b16 %v409
        %v512 = vunpack.c.h.b16 %v409
        %v513 = vunpack.c.l.b16 %v410
        %v514 = vunpack.c.h.b16 %v410
        %v515 = vunpack.c.l.b16 %v411
        %v516 = vunpack.c.h.b16 %v411
        %v517 = vunpack.c.l.b16 %v412
        %v518 = vunpack.c.h.b16 %v412
        %v519 = vunpack.c.l.b16 %v413
        %v520 = vunpack.c.h.b16 %v413
        %v521 = vunpack.c.l.b16 %v414
        %v522 = vunpack.c.h.b16 %v414
        %v523 = vpack.c.b16 %v461, %v459
        %v524 = vpack.c.b16 %v462, %v460
        %v525 = vpack.c.b16 %v465, %v463
        %v526 = vpack.c.b16 %v466, %v464
        %v527 = vpack.c.b16 %v469, %v467
        %v528 = vpack.c.b16 %v470, %v468
        %v529 = vpack.c.b16 %v473, %v471
        %v530 = vpack.c.b16 %v474, %v472
        %v531 = vpack.c.b16 %v477, %v475
        %v532 = vpack.c.b16 %v478, %v476
        %v533 = vpack.c.b16 %v481, %v479
        %v534 = vpack.c.b16 %v482, %v480
        %v535 = vpack.c.b16 %v485, %v483
        %v536 = vpack.c.b16 %v486, %v484
        %v537 = vpack.c.b16 %v489, %v487
        %v538 = vpack.c.b16 %v490, %v488
        %v539 = vpack.c.b16 %v493, %v491
        %v540 = vpack.c.b16 %v494, %v492
        %v541 = vpack.c.b16 %v497, %v495
        %v542 = vpack.c.b16 %v498, %v496
        %v543 = vpack.c.b16 %v501, %v499
        %v544 = vpack.c.b16 %v502, %v500
        %v545 = vpack.c.b16 %v505, %v503
        %v546 = vpack.c.b16 %v506, %v504
        %v547 = vpack.c.b16 %v509, %v507
        %v548 = vpack.c.b16 %v510, %v508
        %v549 = vpack.c.b16 %v513, %v511
        %v550 = vpack.c.b16 %v514, %v512
        %v551 = vpack.c.b16 %v517, %v515
        %v552 = vpack.c.b16 %v518, %v516
        %v553 = vpack.c.b16 %v521, %v519
        %v554 = vpack.c.b16 %v522, %v520
        %587 = vmatprep.subr.bf16.mxu0 %v524
        %588 = vmatpush1.bf16.msra.mxu0 %v523
        %589 = vmatprep.subr.bf16.mxu0 %v526
        %590 = vmatpush1.bf16.msra.mxu0 %v525
        %591 = vmatprep.subr.bf16.mxu0 %v528
        %592 = vmatpush1.bf16.msra.mxu0 %v527
        %593 = vmatprep.subr.bf16.mxu0 %v530
        %594 = vmatpush1.bf16.msra.mxu0 %v529
        %595 = vmatprep.subr.bf16.mxu0 %v532
        %596 = vmatpush1.bf16.msra.mxu0 %v531
        %597 = vmatprep.subr.bf16.mxu0 %v534
        %598 = vmatpush1.bf16.msra.mxu0 %v533
        %599 = vmatprep.subr.bf16.mxu0 %v536
        %600 = vmatpush1.bf16.msra.mxu0 %v535
        %601 = vmatprep.subr.bf16.mxu0 %v538
        %602 = vmatpush1.bf16.msra.mxu0 %v537
        %603 = vmatprep.subr.bf16.mxu0 %v540
        %604 = vmatpush1.bf16.msra.mxu0 %v539
        %605 = vmatprep.subr.bf16.mxu0 %v542
        %606 = vmatpush1.bf16.msra.mxu0 %v541
        %607 = vmatprep.subr.bf16.mxu0 %v544
        %608 = vmatpush1.bf16.msra.mxu0 %v543
        %609 = vmatprep.subr.bf16.mxu0 %v546
        %610 = vmatpush1.bf16.msra.mxu0 %v545
        %611 = vmatprep.subr.bf16.mxu0 %v548
        %612 = vmatpush1.bf16.msra.mxu0 %v547
        %613 = vmatprep.subr.bf16.mxu0 %v550
        %614 = vmatpush1.bf16.msra.mxu0 %v549
        %615 = vmatprep.subr.bf16.mxu0 %v552
        %616 = vmatpush1.bf16.msra.mxu0 %v551
        %617 = vmatprep.subr.bf16.mxu0 %v554
        %618 = vmatpush1.bf16.msra.mxu0 %v553
        %619 = vmatprep.mubr.bf16.mxu0 %v382
        %620 = vmatmul.mubr.bf16.gmra.mrb[0].mxu0 %v381
        %v621 = vpop.f32.mrb[0].mxu0
        %v622 = vadd.f32 %v420, %v621
        %v623 = vpop.f32.mrb[0].mxu0
        %v624 = vadd.f32 %v424, %v623
        %v625 = vpop.f32.mrb[0].mxu0
        %v626 = vadd.f32 %v420, %v625
        %v627 = vpop.f32.mrb[0].mxu0
        %v628 = vadd.f32 %v424, %v627
        %629 = vdwg.mxu0
        %v630 = vmax.f32 %v622, 0.0
        %v631 = vmax.f32 %v624, 0.0
        %v632 = vmax.f32 %v626, 0.0
        %v633 = vmax.f32 %v628, 0.0
        %v634 = vpack.c.bf16 %v632, %v630
        %v635 = vpack.c.bf16 %v633, %v631
        %v636 = vld [vmem:[%s5] sm:$0xf]
        %v637 = vld [vmem:[%s5 + $0x4] sm:$0xf]
        %v638 = vld [vmem:[%s5 + $0x8] sm:$0xf]
        %v639 = vld [vmem:[%s5 + $0xc] sm:$0xf]
        %v640 = vld [vmem:[%s5 + $0x10] sm:$0xf]
        %v641 = vld [vmem:[%s5 + $0x14] sm:$0xf]
        %v642 = vld [vmem:[%s5 + $0x18] sm:$0xf]
        %v643 = vld [vmem:[%s5 + $0x1c] sm:$0xf]
        %v644 = vld [vmem:[%s5 + $0x20] sm:$0xf]
        %v645 = vld [vmem:[%s5 + $0x24] sm:$0xf]
        %v646 = vld [vmem:[%s5 + $0x28] sm:$0xf]
        %v647 = vld [vmem:[%s5 + $0x2c] sm:$0xf]
        %v648 = vld [vmem:[%s5 + $0x30] sm:$0xf]
        %v649 = vld [vmem:[%s5 + $0x34] sm:$0xf]
        %v650 = vld [vmem:[%s5 + $0x38] sm:$0xf]
        %v651 = vld [vmem:[%s5 + $0x3c] sm:$0xf]
        %v652 = vld [vmem:[%s5 + $0x40] sm:$0xf]
        %v653 = vld [vmem:[%s5 + $0x44] sm:$0xf]
        %v654 = vld [vmem:[%s5 + $0x48] sm:$0xf]
        %v655 = vld [vmem:[%s5 + $0x4c] sm:$0xf]
        %v656 = vld [vmem:[%s5 + $0x50] sm:$0xf]
        %v657 = vld [vmem:[%s5 + $0x54] sm:$0xf]
        %v658 = vld [vmem:[%s5 + $0x58] sm:$0xf]
        %v659 = vld [vmem:[%s5 + $0x5c] sm:$0xf]
        %v660 = vld [vmem:[%s5 + $0x60] sm:$0xf]
        %v661 = vld [vmem:[%s5 + $0x64] sm:$0xf]
        %v662 = vld [vmem:[%s5 + $0x68] sm:$0xf]
        %v663 = vld [vmem:[%s5 + $0x6c] sm:$0xf]
        %v664 = vld [vmem:[%s5 + $0x70] sm:$0xf]
        %v665 = vld [vmem:[%s5 + $0x74] sm:$0xf]
        %v666 = vld [vmem:[%s5 + $0x78] sm:$0xf]
        %v667 = vld [vmem:[%s5 + $0x7c] sm:$0xf]
        %v668 = vld [vmem:[%s6] sm:$0x1]
        %v670 = vlaneseq
        %v671 = vshrl.u32 %v670, 7
        %v672 = vsub.s32 0, %v671
        %v673 = vrot.slane %v668, %v672
        %v707 = vunpack.c.l.b16 %v636
        %v708 = vunpack.c.l.b16 %v637
        %v709 = vunpack.c.l.b16 %v638
        %v710 = vunpack.c.l.b16 %v639
        %v711 = vunpack.c.l.b16 %v640
        %v712 = vunpack.c.l.b16 %v641
        %v713 = vunpack.c.l.b16 %v642
        %v714 = vunpack.c.l.b16 %v643
        %v715 = vunpack.c.l.b16 %v644
        %v716 = vunpack.c.l.b16 %v645
        %v717 = vunpack.c.l.b16 %v646
        %v718 = vunpack.c.l.b16 %v647
        %v719 = vunpack.c.l.b16 %v648
        %v720 = vunpack.c.l.b16 %v649
        %v721 = vunpack.c.l.b16 %v650
        %v722 = vunpack.c.l.b16 %v651
        %v723 = vunpack.c.l.b16 %v652
        %v724 = vunpack.c.l.b16 %v653
        %v725 = vunpack.c.l.b16 %v654
        %v726 = vunpack.c.l.b16 %v655
        %v727 = vunpack.c.l.b16 %v656
        %v728 = vunpack.c.l.b16 %v657
        %v729 = vunpack.c.l.b16 %v658
        %v730 = vunpack.c.l.b16 %v659
        %v731 = vunpack.c.l.b16 %v660
        %v732 = vunpack.c.l.b16 %v661
        %v733 = vunpack.c.l.b16 %v662
        %v734 = vunpack.c.l.b16 %v663
        %v735 = vunpack.c.l.b16 %v664
        %v736 = vunpack.c.l.b16 %v665
        %v737 = vunpack.c.l.b16 %v666
        %v738 = vunpack.c.l.b16 %v667
        %v739 = vpack.c.b16 %v708, %v707
        %v740 = vpack.c.b16 %v710, %v709
        %v741 = vpack.c.b16 %v712, %v711
        %v742 = vpack.c.b16 %v714, %v713
        %v743 = vpack.c.b16 %v716, %v715
        %v744 = vpack.c.b16 %v718, %v717
        %v745 = vpack.c.b16 %v720, %v719
        %v746 = vpack.c.b16 %v722, %v721
        %v747 = vpack.c.b16 %v724, %v723
        %v748 = vpack.c.b16 %v726, %v725
        %v749 = vpack.c.b16 %v728, %v727
        %v750 = vpack.c.b16 %v730, %v729
        %v751 = vpack.c.b16 %v732, %v731
        %v752 = vpack.c.b16 %v734, %v733
        %v753 = vpack.c.b16 %v736, %v735
        %v754 = vpack.c.b16 %v738, %v737
        %771 = vmatprep.subr.bf16.mxu0 0
        %772 = vmatpush1.bf16.msra.mxu0 %v739
        %773 = vmatprep.subr.bf16.mxu0 0
        %774 = vmatpush1.bf16.msra.mxu0 %v740
        %775 = vmatprep.subr.bf16.mxu0 0
        %776 = vmatpush1.bf16.msra.mxu0 %v741
        %777 = vmatprep.subr.bf16.mxu0 0
        %778 = vmatpush1.bf16.msra.mxu0 %v742
        %779 = vmatprep.subr.bf16.mxu0 0
        %780 = vmatpush1.bf16.msra.mxu0 %v743
        %781 = vmatprep.subr.bf16.mxu0 0
        %782 = vmatpush1.bf16.msra.mxu0 %v744
        %783 = vmatprep.subr.bf16.mxu0 0
        %784 = vmatpush1.bf16.msra.mxu0 %v745
        %785 = vmatprep.subr.bf16.mxu0 0
        %786 = vmatpush1.bf16.msra.mxu0 %v746
        %787 = vmatprep.subr.bf16.mxu0 0
        %788 = vmatpush1.bf16.msra.mxu0 %v747
        %789 = vmatprep.subr.bf16.mxu0 0
        %790 = vmatpush1.bf16.msra.mxu0 %v748
        %791 = vmatprep.subr.bf16.mxu0 0
        %792 = vmatpush1.bf16.msra.mxu0 %v749
        %793 = vmatprep.subr.bf16.mxu0 0
        %794 = vmatpush1.bf16.msra.mxu0 %v750
        %795 = vmatprep.subr.bf16.mxu0 0
        %796 = vmatpush1.bf16.msra.mxu0 %v751
        %797 = vmatprep.subr.bf16.mxu0 0
        %798 = vmatpush1.bf16.msra.mxu0 %v752
        %799 = vmatprep.subr.bf16.mxu0 0
        %800 = vmatpush1.bf16.msra.mxu0 %v753
        %801 = vmatprep.subr.bf16.mxu0 0
        %802 = vmatpush1.bf16.msra.mxu0 %v754
        %803 = vmatprep.mubr.bf16.mxu0 %v635
        %804 = vmatmul.mubr.bf16.gmra.mrb[0].mxu0 %v634
        %v805 = vpop.f32.mrb[0].mxu0
        %v806 = vadd.f32 %v673, %v805
        %v807 = vpop.f32.mrb[0].mxu0
        %v808 = vpop.f32.mrb[0].mxu0
        %v809 = vadd.f32 %v673, %v808
        %v810 = vpop.f32.mrb[0].mxu0
        %811 = vdwg.mxu0
        %812 = vst.msk [vmem:[%s295] sm:$0xff] %vm323, %v806
        %813 = vst.msk [vmem:[%s295 + $0x8] sm:$0xff] %vm323, %v809
        %s814 = smul.u32 2, %s19
        %p815 = scmp.lt.s32.totalorder %s814, 5
        %s816 = scalar_select %p815, %s814, 5
        %s817 = smul.addr %s816, 8
        %s818 = scalar_lea.vmem %s7, %s817
        // Predicated region
        $region53: #{tpu_custom_call.1} parent=47 // pred_check
          %p819 = pneg %p189
        $region54: #{tpu_custom_call.1} parent=47 // pred_check_branch
          %821 = sbr.rel (%p819) target = $region56
        $region55: #{tpu_custom_call.1} parent=47 // pred_region
          %s822 = smul.u32 2, %s19
        $region56: #{tpu_custom_call.1} parent=47 // pred_fallthru
          _
      $region48: #{tpu_custom_call.1} parent=5 // pred_fallthru
        _
      %p823 = scmp.le.s32.totalorder 2, %s14
      // Predicated region
      $region57: #{tpu_custom_call.1} parent=5 // pred_check
        %p824 = pneg %p823
      $region58: #{tpu_custom_call.1} parent=5 // pred_check_branch
        %826 = sbr.rel (%p824) target = $region60
      $region59: #{tpu_custom_call.1} parent=5 // pred_region
        %s827 = ssub.s32 %s14, 2
        // Predicated region
        $region61: #{tpu_custom_call.1} parent=59 // pred_check
          %p828 = pneg %p195
        $region62: #{tpu_custom_call.1} parent=59 // pred_check_branch
          %830 = sbr.rel (%p828) target = $region64
        $region63: #{tpu_custom_call.1} parent=59 // pred_region
          %s831 = smul.u32 2, %s20
          %p832 = scmp.lt.s32.totalorder %s831, 5
          %s833 = scalar_select %p832, %s831, 5
          %s834 = smul.addr %s833, 8
          %s835 = scalar_lea.vmem %s7, %s834
        $region64: #{tpu_custom_call.1} parent=59 // pred_fallthru
          _
      $region60: #{tpu_custom_call.1} parent=5 // pred_fallthru
        _
    $region6: #{tpu_custom_call.1} parent=1 // loop_footer
      %s18 = sadd.s32 1, %s14
    $region7: #{tpu_custom_call.1} parent=1 // loop_footer_branch
      %13 = sbr.rel target = $region3
    $region8: #{tpu_custom_call.1} parent=1 // loop_exit
      _
    %836 = vsyncpa [#allocation3], 1
    %s837 = scalar_lea.sflag [#allocation3], 1
    %838 = vsyncpa %s837, 1

</llo_original>
